<compile_context>
chip_gen: v5e
topology: v5e:2x2
jax: 0.10.0
libtpu: 0.0.40
codegen_flags: <defaults>
</compile_context>

<pallas_src>
import jax
import jax.numpy as jnp
from jax.experimental import pallas as pl
from jax.experimental.pallas import tpu as pltpu

F = 5     # in_features of nn.Linear(5, 1)
G = 128   # logical rows packed per lane-dense row (lane width)


def _round_up(n, m):
    return ((n + m - 1) // m) * m


def _ttc_kernel(x_ref, wexp_ref, b_ref, o_ref):
    """One (TB, 640) tile of packed batch rows.

    x_ref:    VMEM (TB, G*F)  float32   (128 logical rows x 5 features per row)
    wexp_ref: VMEM (G*F, G)   bfloat16  (banded kron(I_128, w) weight, resident)
    b_ref:    SMEM (1,)       float32
    o_ref:    VMEM (TB, G)    float32   (lane-dense: one result per lane)
    """
    x = x_ref[...].astype(jnp.bfloat16)                       # cheap VPU pack
    acc = jnp.dot(x, wexp_ref[...],                           # MXU, f32 accum
                  preferred_element_type=jnp.float32)
    # Sigmoid -> EUP (separate issue slot from the MXU/VPU work above).
    o_ref[...] = jax.nn.sigmoid(acc + b_ref[0]).astype(o_ref.dtype)


def ttc_forward(x, w, b, *, block_groups=512):
    """Computes sigmoid(x @ w.T + b), matching torch TTC.forward.

    x: (B, 5) float32
    w: torch-layout weight, reshapeable to (5,)  (e.g. shape (1, 5))
    b: bias, reshapeable to (1,)
    returns: (B, 1) float32
    """
    B, f = x.shape
    assert f == F, f"expected {F} input features, got {f}"
    x = jnp.asarray(x, jnp.float32)
    w = jnp.asarray(w, jnp.float32).reshape(F)
    b = jnp.asarray(b, jnp.float32).reshape(1)

    # Row-groups of 128 logical rows; tile (second-minor dim) must be a
    # multiple of 8 (f32 sublane) or the full extent.
    r = pl.cdiv(B, G)
    block_groups = max(8, _round_up(block_groups, 8))
    tb = min(block_groups, _round_up(r, 8))
    rp = _round_up(r, tb)
    bp = rp * G
    if bp != B:
        # Padded rows compute sigmoid(b) and are sliced off below.
        x = jnp.pad(x, ((0, bp - B), (0, 0)))

    # Free row-major reshape: x2[i, j*F + k] == x[i*G + j, k]  -> lane-dense.
    x2 = x.reshape(rp, G * F)

    # Banded weight: W_exp[j*F + k, j'] = (j == j') * w[k], shape (640, 128).
    w_exp = (jnp.eye(G, dtype=jnp.float32)[:, None, :]
             * w[None, :, None]).reshape(G * F, G).astype(jnp.bfloat16)

    grid = (rp // tb,)

    out = pl.pallas_call(
        _ttc_kernel,
        out_shape=jax.ShapeDtypeStruct((rp, G), jnp.float32),
        grid_spec=pltpu.PrefetchScalarGridSpec(
            num_scalar_prefetch=0,
            grid=grid,
            in_specs=[
                pl.BlockSpec((tb, G * F), lambda i: (i, 0)),          # x tile
                pl.BlockSpec((G * F, G), lambda i: (0, 0)),           # W_exp (resident)
                pl.BlockSpec(memory_space=pltpu.MemorySpace.SMEM),    # b scalar
            ],
            out_specs=pl.BlockSpec((tb, G), lambda i: (i, 0)),
        ),
        compiler_params=pltpu.CompilerParams(
            # TODO(synk): on v7x, verify both TensorCores take grid steps (xprof);
            # if not, switch this axis to pltpu.CORE_PARALLEL / pl.core_map.
            dimension_semantics=("parallel",),
            vmem_limit_bytes=32 * 1024 * 1024,
        ),
        cost_estimate=pl.CostEstimate(
            flops=2 * rp * (G * F) * G,                   # banded MXU matmul
            transcendentals=rp * G,                       # sigmoid per logical row
            bytes_accessed=bp * F * 4 + rp * G * 4 + (G * F) * G * 2,
        ),
    )(x2, w_exp, b)

    # Free reshape back to one result per logical row, then drop padding.
    return out.reshape(bp, 1)[:B]


if __name__ == "__main__":
    key = jax.random.PRNGKey(0)
    kx, kw, kb = jax.random.split(key, 3)

    # Shapes consistent with the module: batches of 5-feature rows.
    B = 300
    x = jax.random.normal(kx, (B, F), dtype=jnp.float32)

    # torch Linear(5, 1) params: weight (out, in) = (1, 5), bias (1,)
    w_torch = jax.random.normal(kw, (1, F), dtype=jnp.float32) * 0.1
    b_torch = jax.random.normal(kb, (1,), dtype=jnp.float32) * 0.1

    # Exact-f32 reference (elementwise, avoids MXU rounding in the reference).
    def ref_fn(xx):
        return jax.nn.sigmoid(
            jnp.sum(xx * w_torch.reshape(1, F), axis=1, keepdims=True) + b_torch)

    # Case 1: default tile, single grid step, B not a multiple of 128.
    out = ttc_forward(x, w_torch, b_torch)
    jax.block_until_ready(out)
    assert out.shape == (B, 1)
    assert jnp.allclose(out, ref_fn(x), atol=3e-3, rtol=0.0), "mismatch vs reference"

    # Case 2: small tile to exercise a multi-step pipelined grid (grid=2).
    B2 = 2000
    x2 = jax.random.normal(kx, (B2, F), dtype=jnp.float32)
    out2 = ttc_forward(x2, w_torch, b_torch, block_groups=8)
    jax.block_until_ready(out2)
    assert out2.shape == (B2, 1)
    assert jnp.allclose(out2, ref_fn(x2), atol=3e-3, rtol=0.0), "mismatch vs reference"

    print("KERNEL_OK")
</pallas_src>

<mosaic_0001>
module attributes {stable_mosaic.version = 11 : i64} {
  func.func @_ttc_kernel(%arg0: i32, %arg1: memref<8x640xf32, #tpu.memory_space<vmem>>, %arg2: memref<640x128xbf16, #tpu.memory_space<vmem>>, %arg3: memref<1xf32, #tpu.memory_space<smem>>, %arg4: memref<8x128xf32, #tpu.memory_space<vmem>>) attributes {dimension_semantics = [#tpu.dimension_semantics<parallel>], iteration_bounds = array<i64: 1>, scalar_prefetch = 0 : i64, scratch_operands = 0 : i64, tpu.core_type = #tpu.core_type<tc>, window_params = [{transform_indices = @transform_0, window_bounds = array<i64: 8, 640>}, {pipeline_mode = #tpu.pipeline_mode<synchronous>, transform_indices = @transform_1, window_bounds = array<i64: 640, 128>}, {transform_indices = @transform_2, window_bounds = array<i64: 1>}, {transform_indices = @transform_3, window_bounds = array<i64: 8, 128>}]} {
    %c0 = arith.constant 0 : index
    %c0_0 = arith.constant 0 : index
    %0 = vector.load %arg1[%c0, %c0_0] : memref<8x640xf32, #tpu.memory_space<vmem>>, vector<8x640xf32>
    %1 = arith.truncf %0 : vector<8x640xf32> to vector<8x640xbf16>
    %c0_1 = arith.constant 0 : index
    %c0_2 = arith.constant 0 : index
    %2 = vector.load %arg2[%c0_1, %c0_2] : memref<640x128xbf16, #tpu.memory_space<vmem>>, vector<640x128xbf16>
    %cst = arith.constant dense<0.000000e+00> : vector<8x128xf32>
    %3 = tpu.matmul %1, %2, %cst {dimension_numbers = #tpu.dot_dimension_numbers<[1], [0], [0], [1], [0, 0, 1, 1], [], []>} : vector<8x640xbf16>, vector<640x128xbf16>, vector<8x128xf32> -> vector<8x128xf32>
    %c0_3 = arith.constant 0 : index
    %4 = memref.load %arg3[%c0_3] : memref<1xf32, #tpu.memory_space<smem>>
    %5 = vector.broadcast %4 : f32 to vector<8x128xf32>
    %6 = arith.addf %3, %5 : vector<8x128xf32>
    %7 = arith.negf %6 : vector<8x128xf32>
    %8 = math.exp %7 : vector<8x128xf32>
    %cst_4 = arith.constant 1.000000e+00 : f32
    %9 = vector.broadcast %cst_4 : f32 to vector<8x128xf32>
    %10 = arith.addf %9, %8 : vector<8x128xf32>
    %11 = arith.divf %9, %10 : vector<8x128xf32>
    %c0_5 = arith.constant 0 : index
    %c0_6 = arith.constant 0 : index
    %12 = vector.load %arg4[%c0_5, %c0_6] : memref<8x128xf32, #tpu.memory_space<vmem>>, vector<8x128xf32>
    tpu.vector_store %arg4[%c0_5, %c0_6], %11 {strides = array<i32>} : memref<8x128xf32, #tpu.memory_space<vmem>>, vector<8x128xf32>,
    return
  }
  func.func @transform_0(%arg0: i32) -> (i32, i32) {
    %c0_i32 = arith.constant 0 : i32
    %c0_i32_0 = arith.constant 0 : i32
    return %arg0, %c0_i32 : i32, i32
  }
  func.func @transform_1(%arg0: i32) -> (i32, i32) {
    %c0_i32 = arith.constant 0 : i32
    %c0_i32_0 = arith.constant 0 : i32
    %c0_i32_1 = arith.constant 0 : i32
    return %c0_i32, %c0_i32_0 : i32, i32
  }
  func.func @transform_2(%arg0: i32) -> i32 {
    %c0_i32 = arith.constant 0 : i32
    %c0_i32_0 = arith.constant 0 : i32
    return %c0_i32 : i32
  }
  func.func @transform_3(%arg0: i32) -> (i32, i32) {
    %c0_i32 = arith.constant 0 : i32
    %c0_i32_0 = arith.constant 0 : i32
    return %arg0, %c0_i32 : i32, i32
  }
}

</mosaic_0001>

<llo_original>
// kernel: tpu_custom_call.1
$region0: #{tpu_custom_call.1}
  #allocation0 [shape = 'u32[]', space=smem, size = 0x4, offset = 0x4, fixed_abs, tag = 'smem constant byte address 0x4 - core index']
  #allocation1 [shape = 'u32[72,128]{1,0:T(1,128)}', space=vmem, size = 0x9000, scoped, tag = 'internal scratch']
  #allocation2 [shape = 'f32[1]{0:T(128)S(6)}', space=smem, size = 0x200, scoped, tag = 'scoped memory for tpu_custom_call.1']
  %s0 = inlined_call_operand.hbm [shape: f32[8,640], index: 0, kind: input, shape index: {}]
  %s1 = inlined_call_operand.hbm [shape: bf16[640,128], index: 1, kind: input, shape index: {}]
  %s2 = inlined_call_operand.<no memory space> [shape: f32[1], index: 2, kind: input, shape index: {}]
  %s3 = inlined_call_operand.hbm [shape: f32[8,128], index: 3, kind: output, shape index: {}]
  %s4 = sld [smem:[#allocation0]]
  $region30: #{tpu_custom_call.1} parent=0
    _
  %s6 = ssub.s32 1, %s4
  %s7 = scalar_select 0, %s6, %s4
  %8 = sst [smem:[#allocation2]] %s2
  $region1: #{tpu_custom_call.1} parent=0
    #allocation3 [shape = 'u8[20480]{0}', space=vmem, size = 0x5000, scoped, tag = 'input window, operand 0, single buffered']
    #allocation4 [shape = 's32[1]{0}', space=sflag, size = 0x4, scoped, tag = 'scoped memory for tpu_custom_call.1']
    #allocation5 [shape = 's32[1]{0}', space=sflag, size = 0x4, scoped, tag = 'scoped memory for tpu_custom_call.1']
    #allocation6 [shape = 'u8[163840]{0}', space=vmem, size = 0x28000, scoped, tag = 'input window, operand 1, single buffered']
    #allocation7 [shape = 's32[1]{0}', space=sflag, size = 0x4, scoped, tag = 'scoped memory for tpu_custom_call.1']
    #allocation8 [shape = 'u8[4096]{0}', space=vmem, size = 0x1000, scoped, tag = 'output window, operand 0, single buffered']
    %9 = vsyncpa [#allocation4], 0
    %10 = vsyncpa [#allocation7], 0
    %11 = vsyncpa [#allocation5], 0
    // Predicated region
    $region2: #{tpu_custom_call.1} parent=1 // pred_check
      _
    $region3: #{tpu_custom_call.1} parent=1 // pred_check_branch
      %13 = sbr.rel (0) target = $region5
    $region4: #{tpu_custom_call.1} parent=1 // pred_region
      %15 = vsyncadd [#allocation4], 0
      %s17 = sshll.u32 %s0, 4
      %s18 = int_to_ptr.hbm [resolvable:$true] %s17
      %s19 = sshll.u32 [#allocation3], 4
      %s20 = int_to_ptr.vmem [resolvable:$true] %s19
      %22 = dma.hbm_to_vmem [thread:$0]  %s18, 640, %s20, [#allocation4]
    $region5: #{tpu_custom_call.1} parent=1 // pred_fallthru
      _
    // Predicated region
    $region6: #{tpu_custom_call.1} parent=1 // pred_check
      _
    $region7: #{tpu_custom_call.1} parent=1 // pred_check_branch
      %24 = sbr.rel (0) target = $region9
    $region8: #{tpu_custom_call.1} parent=1 // pred_region
      %26 = vsyncadd [#allocation7], 0
      %s27 = sshll.u32 %s1, 4
      %s28 = int_to_ptr.hbm [resolvable:$true] %s27
      %s29 = sshll.u32 [#allocation6], 4
      %s30 = int_to_ptr.vmem [resolvable:$true] %s29
      %35 = dma.hbm_to_vmem [thread:$0]  %s28, 5120, %s30, [#allocation7], 64, 64, 4
    $region9: #{tpu_custom_call.1} parent=1 // pred_fallthru
      _
    // Predicated region
    $region10: #{tpu_custom_call.1} parent=1 // pred_check
      _
    $region11: #{tpu_custom_call.1} parent=1 // pred_check_branch
      %37 = sbr.rel (0) target = $region13
    $region12: #{tpu_custom_call.1} parent=1 // pred_region
      _
    $region13: #{tpu_custom_call.1} parent=1 // pred_fallthru
      _
    // Predicated region
    $region14: #{tpu_custom_call.1} parent=1 // pred_check
      _
    $region15: #{tpu_custom_call.1} parent=1 // pred_check_branch
      %39 = sbr.rel (0) target = $region17
    $region16: #{tpu_custom_call.1} parent=1 // pred_region
      %41 = dma.done [#allocation4], 640
    $region17: #{tpu_custom_call.1} parent=1 // pred_fallthru
      _
    // Predicated region
    $region18: #{tpu_custom_call.1} parent=1 // pred_check
      _
    $region19: #{tpu_custom_call.1} parent=1 // pred_check_branch
      %43 = sbr.rel (0) target = $region21
    $region20: #{tpu_custom_call.1} parent=1 // pred_region
      %45 = dma.done [#allocation7], 5120
    $region21: #{tpu_custom_call.1} parent=1 // pred_fallthru
      _
    %v46 = vld [vmem:[#allocation3] sm:$0xff]
    %v47 = vld [vmem:[#allocation3 + $0x8] sm:$0xff]
    %v48 = vld [vmem:[#allocation3 + $0x10] sm:$0xff]
    %v49 = vld [vmem:[#allocation3 + $0x18] sm:$0xff]
    %v50 = vld [vmem:[#allocation3 + $0x20] sm:$0xff]
    %v51 = vpack.c.bf16 %v46, %v46
    %v52 = vpack.c.bf16 %v47, %v47
    %v53 = vpack.c.bf16 %v48, %v48
    %v54 = vpack.c.bf16 %v49, %v49
    %v55 = vpack.c.bf16 %v50, %v50
    %v56 = vld [vmem:[#allocation6] sm:$0xf]
    %v57 = vld [vmem:[#allocation6 + $0x4] sm:$0xf]
    %v58 = vld [vmem:[#allocation6 + $0x8] sm:$0xf]
    %v59 = vld [vmem:[#allocation6 + $0xc] sm:$0xf]
    %v60 = vld [vmem:[#allocation6 + $0x10] sm:$0xf]
    %v61 = vld [vmem:[#allocation6 + $0x14] sm:$0xf]
    %v62 = vld [vmem:[#allocation6 + $0x18] sm:$0xf]
    %v63 = vld [vmem:[#allocation6 + $0x1c] sm:$0xf]
    %v64 = vld [vmem:[#allocation6 + $0x20] sm:$0xf]
    %v65 = vld [vmem:[#allocation6 + $0x24] sm:$0xf]
    %v66 = vld [vmem:[#allocation6 + $0x28] sm:$0xf]
    %v67 = vld [vmem:[#allocation6 + $0x2c] sm:$0xf]
    %v68 = vld [vmem:[#allocation6 + $0x30] sm:$0xf]
    %v69 = vld [vmem:[#allocation6 + $0x34] sm:$0xf]
    %v70 = vld [vmem:[#allocation6 + $0x38] sm:$0xf]
    %v71 = vld [vmem:[#allocation6 + $0x3c] sm:$0xf]
    %v72 = vld [vmem:[#allocation6 + $0x40] sm:$0xf]
    %v73 = vld [vmem:[#allocation6 + $0x44] sm:$0xf]
    %v74 = vld [vmem:[#allocation6 + $0x48] sm:$0xf]
    %v75 = vld [vmem:[#allocation6 + $0x4c] sm:$0xf]
    %v76 = vld [vmem:[#allocation6 + $0x50] sm:$0xf]
    %v77 = vld [vmem:[#allocation6 + $0x54] sm:$0xf]
    %v78 = vld [vmem:[#allocation6 + $0x58] sm:$0xf]
    %v79 = vld [vmem:[#allocation6 + $0x5c] sm:$0xf]
    %v80 = vld [vmem:[#allocation6 + $0x60] sm:$0xf]
    %v81 = vld [vmem:[#allocation6 + $0x64] sm:$0xf]
    %v82 = vld [vmem:[#allocation6 + $0x68] sm:$0xf]
    %v83 = vld [vmem:[#allocation6 + $0x6c] sm:$0xf]
    %v84 = vld [vmem:[#allocation6 + $0x70] sm:$0xf]
    %v85 = vld [vmem:[#allocation6 + $0x74] sm:$0xf]
    %v86 = vld [vmem:[#allocation6 + $0x78] sm:$0xf]
    %v87 = vld [vmem:[#allocation6 + $0x7c] sm:$0xf]
    %v88 = vld [vmem:[#allocation6 + $0x80] sm:$0xf]
    %v89 = vld [vmem:[#allocation6 + $0x84] sm:$0xf]
    %v90 = vld [vmem:[#allocation6 + $0x88] sm:$0xf]
    %v91 = vld [vmem:[#allocation6 + $0x8c] sm:$0xf]
    %v92 = vld [vmem:[#allocation6 + $0x90] sm:$0xf]
    %v93 = vld [vmem:[#allocation6 + $0x94] sm:$0xf]
    %v94 = vld [vmem:[#allocation6 + $0x98] sm:$0xf]
    %v95 = vld [vmem:[#allocation6 + $0x9c] sm:$0xf]
    %v96 = vld [vmem:[#allocation6 + $0xa0] sm:$0xf]
    %v97 = vld [vmem:[#allocation6 + $0xa4] sm:$0xf]
    %v98 = vld [vmem:[#allocation6 + $0xa8] sm:$0xf]
    %v99 = vld [vmem:[#allocation6 + $0xac] sm:$0xf]
    %v100 = vld [vmem:[#allocation6 + $0xb0] sm:$0xf]
    %v101 = vld [vmem:[#allocation6 + $0xb4] sm:$0xf]
    %v102 = vld [vmem:[#allocation6 + $0xb8] sm:$0xf]
    %v103 = vld [vmem:[#allocation6 + $0xbc] sm:$0xf]
    %v104 = vld [vmem:[#allocation6 + $0xc0] sm:$0xf]
    %v105 = vld [vmem:[#allocation6 + $0xc4] sm:$0xf]
    %v106 = vld [vmem:[#allocation6 + $0xc8] sm:$0xf]
    %v107 = vld [vmem:[#allocation6 + $0xcc] sm:$0xf]
    %v108 = vld [vmem:[#allocation6 + $0xd0] sm:$0xf]
    %v109 = vld [vmem:[#allocation6 + $0xd4] sm:$0xf]
    %v110 = vld [vmem:[#allocation6 + $0xd8] sm:$0xf]
    %v111 = vld [vmem:[#allocation6 + $0xdc] sm:$0xf]
    %v112 = vld [vmem:[#allocation6 + $0xe0] sm:$0xf]
    %v113 = vld [vmem:[#allocation6 + $0xe4] sm:$0xf]
    %v114 = vld [vmem:[#allocation6 + $0xe8] sm:$0xf]
    %v115 = vld [vmem:[#allocation6 + $0xec] sm:$0xf]
    %v116 = vld [vmem:[#allocation6 + $0xf0] sm:$0xf]
    %v117 = vld [vmem:[#allocation6 + $0xf4] sm:$0xf]
    %v118 = vld [vmem:[#allocation6 + $0xf8] sm:$0xf]
    %v119 = vld [vmem:[#allocation6 + $0xfc] sm:$0xf]
    %v120 = vld [vmem:[#allocation6 + $0x100] sm:$0xf]
    %v121 = vld [vmem:[#allocation6 + $0x104] sm:$0xf]
    %v122 = vld [vmem:[#allocation6 + $0x108] sm:$0xf]
    %v123 = vld [vmem:[#allocation6 + $0x10c] sm:$0xf]
    %v124 = vld [vmem:[#allocation6 + $0x110] sm:$0xf]
    %v125 = vld [vmem:[#allocation6 + $0x114] sm:$0xf]
    %v126 = vld [vmem:[#allocation6 + $0x118] sm:$0xf]
    %v127 = vld [vmem:[#allocation6 + $0x11c] sm:$0xf]
    %v128 = vld [vmem:[#allocation6 + $0x120] sm:$0xf]
    %v129 = vld [vmem:[#allocation6 + $0x124] sm:$0xf]
    %v130 = vld [vmem:[#allocation6 + $0x128] sm:$0xf]
    %v131 = vld [vmem:[#allocation6 + $0x12c] sm:$0xf]
    %v132 = vld [vmem:[#allocation6 + $0x130] sm:$0xf]
    %v133 = vld [vmem:[#allocation6 + $0x134] sm:$0xf]
    %v134 = vld [vmem:[#allocation6 + $0x138] sm:$0xf]
    %v135 = vld [vmem:[#allocation6 + $0x13c] sm:$0xf]
    %s136 = sld [smem:[#allocation2]]
    %v137 = vstv %s136
    %v218 = vunpack.c.l.b16 %v56
    %v219 = vunpack.c.l.b16 %v57
    %v220 = vunpack.c.l.b16 %v58
    %v221 = vunpack.c.l.b16 %v59
    %v222 = vunpack.c.l.b16 %v60
    %v223 = vunpack.c.l.b16 %v61
    %v224 = vunpack.c.l.b16 %v62
    %v225 = vunpack.c.l.b16 %v63
    %v226 = vunpack.c.l.b16 %v64
    %v227 = vunpack.c.l.b16 %v65
    %v228 = vunpack.c.l.b16 %v66
    %v229 = vunpack.c.l.b16 %v67
    %v230 = vunpack.c.l.b16 %v68
    %v231 = vunpack.c.l.b16 %v69
    %v232 = vunpack.c.l.b16 %v70
    %v233 = vunpack.c.l.b16 %v71
    %v234 = vunpack.c.l.b16 %v72
    %v235 = vunpack.c.l.b16 %v73
    %v236 = vunpack.c.l.b16 %v74
    %v237 = vunpack.c.l.b16 %v75
    %v238 = vunpack.c.l.b16 %v76
    %v239 = vunpack.c.l.b16 %v77
    %v240 = vunpack.c.l.b16 %v78
    %v241 = vunpack.c.l.b16 %v79
    %v242 = vunpack.c.l.b16 %v80
    %v243 = vunpack.c.l.b16 %v81
    %v244 = vunpack.c.l.b16 %v82
    %v245 = vunpack.c.l.b16 %v83
    %v246 = vunpack.c.l.b16 %v84
    %v247 = vunpack.c.l.b16 %v85
    %v248 = vunpack.c.l.b16 %v86
    %v249 = vunpack.c.l.b16 %v87
    %v250 = vunpack.c.l.b16 %v88
    %v251 = vunpack.c.l.b16 %v89
    %v252 = vunpack.c.l.b16 %v90
    %v253 = vunpack.c.l.b16 %v91
    %v254 = vunpack.c.l.b16 %v92
    %v255 = vunpack.c.l.b16 %v93
    %v256 = vunpack.c.l.b16 %v94
    %v257 = vunpack.c.l.b16 %v95
    %v258 = vunpack.c.l.b16 %v96
    %v259 = vunpack.c.l.b16 %v97
    %v260 = vunpack.c.l.b16 %v98
    %v261 = vunpack.c.l.b16 %v99
    %v262 = vunpack.c.l.b16 %v100
    %v263 = vunpack.c.l.b16 %v101
    %v264 = vunpack.c.l.b16 %v102
    %v265 = vunpack.c.l.b16 %v103
    %v266 = vunpack.c.l.b16 %v104
    %v267 = vunpack.c.l.b16 %v105
    %v268 = vunpack.c.l.b16 %v106
    %v269 = vunpack.c.l.b16 %v107
    %v270 = vunpack.c.l.b16 %v108
    %v271 = vunpack.c.l.b16 %v109
    %v272 = vunpack.c.l.b16 %v110
    %v273 = vunpack.c.l.b16 %v111
    %v274 = vunpack.c.l.b16 %v112
    %v275 = vunpack.c.l.b16 %v113
    %v276 = vunpack.c.l.b16 %v114
    %v277 = vunpack.c.l.b16 %v115
    %v278 = vunpack.c.l.b16 %v116
    %v279 = vunpack.c.l.b16 %v117
    %v280 = vunpack.c.l.b16 %v118
    %v281 = vunpack.c.l.b16 %v119
    %v282 = vunpack.c.l.b16 %v120
    %v283 = vunpack.c.l.b16 %v121
    %v284 = vunpack.c.l.b16 %v122
    %v285 = vunpack.c.l.b16 %v123
    %v286 = vunpack.c.l.b16 %v124
    %v287 = vunpack.c.l.b16 %v125
    %v288 = vunpack.c.l.b16 %v126
    %v289 = vunpack.c.l.b16 %v127
    %v290 = vunpack.c.l.b16 %v128
    %v291 = vunpack.c.l.b16 %v129
    %v292 = vunpack.c.l.b16 %v130
    %v293 = vunpack.c.l.b16 %v131
    %v294 = vunpack.c.l.b16 %v132
    %v295 = vunpack.c.l.b16 %v133
    %v296 = vunpack.c.l.b16 %v134
    %v297 = vunpack.c.l.b16 %v135
    %v298 = vpack.c.b16 %v219, %v218
    %v299 = vpack.c.b16 %v221, %v220
    %v300 = vpack.c.b16 %v223, %v222
    %v301 = vpack.c.b16 %v225, %v224
    %v302 = vpack.c.b16 %v227, %v226
    %v303 = vpack.c.b16 %v229, %v228
    %v304 = vpack.c.b16 %v231, %v230
    %v305 = vpack.c.b16 %v233, %v232
    %v306 = vpack.c.b16 %v235, %v234
    %v307 = vpack.c.b16 %v237, %v236
    %v308 = vpack.c.b16 %v239, %v238
    %v309 = vpack.c.b16 %v241, %v240
    %v310 = vpack.c.b16 %v243, %v242
    %v311 = vpack.c.b16 %v245, %v244
    %v312 = vpack.c.b16 %v247, %v246
    %v313 = vpack.c.b16 %v249, %v248
    %v314 = vpack.c.b16 %v251, %v250
    %v315 = vpack.c.b16 %v253, %v252
    %v316 = vpack.c.b16 %v255, %v254
    %v317 = vpack.c.b16 %v257, %v256
    %v318 = vpack.c.b16 %v259, %v258
    %v319 = vpack.c.b16 %v261, %v260
    %v320 = vpack.c.b16 %v263, %v262
    %v321 = vpack.c.b16 %v265, %v264
    %v322 = vpack.c.b16 %v267, %v266
    %v323 = vpack.c.b16 %v269, %v268
    %v324 = vpack.c.b16 %v271, %v270
    %v325 = vpack.c.b16 %v273, %v272
    %v326 = vpack.c.b16 %v275, %v274
    %v327 = vpack.c.b16 %v277, %v276
    %v328 = vpack.c.b16 %v279, %v278
    %v329 = vpack.c.b16 %v281, %v280
    %v330 = vpack.c.b16 %v283, %v282
    %v331 = vpack.c.b16 %v285, %v284
    %v332 = vpack.c.b16 %v287, %v286
    %v333 = vpack.c.b16 %v289, %v288
    %v334 = vpack.c.b16 %v291, %v290
    %v335 = vpack.c.b16 %v293, %v292
    %v336 = vpack.c.b16 %v295, %v294
    %v337 = vpack.c.b16 %v297, %v296
    %378 = vmatpush.bf16.msra.mxu0 %v305
    %379 = vmatpush.bf16.msra.mxu0 %v304
    %380 = vmatpush.bf16.msra.mxu0 %v303
    %381 = vmatpush.bf16.msra.mxu0 %v302
    %382 = vmatpush.bf16.msra.mxu0 %v301
    %383 = vmatpush.bf16.msra.mxu0 %v300
    %384 = vmatpush.bf16.msra.mxu0 %v299
    %385 = vmatpush.bf16.msra.mxu0 %v298
    %386 = vmatmul.bf16.gmra.mxu0 %v51
    %v387 = vpop.f32.mrf.mxu0
    %v388 = vadd.f32 %v137, %v387
    %v389 = vpop.f32.mrf.mxu0
    %390 = vdwg.mxu0
    %391 = vmatpush.bf16.msra.mxu0 %v313
    %392 = vmatpush.bf16.msra.mxu0 %v312
    %393 = vmatpush.bf16.msra.mxu0 %v311
    %394 = vmatpush.bf16.msra.mxu0 %v310
    %395 = vmatpush.bf16.msra.mxu0 %v309
    %396 = vmatpush.bf16.msra.mxu0 %v308
    %397 = vmatpush.bf16.msra.mxu0 %v307
    %398 = vmatpush.bf16.msra.mxu0 %v306
    %399 = vmatmul.bf16.gmra.mxu0 %v52
    %v400 = vpop.f32.mrf.mxu0
    %v401 = vadd.f32 %v388, %v400
    %v402 = vpop.f32.mrf.mxu0
    %403 = vdwg.mxu0
    %404 = vmatpush.bf16.msra.mxu0 %v321
    %405 = vmatpush.bf16.msra.mxu0 %v320
    %406 = vmatpush.bf16.msra.mxu0 %v319
    %407 = vmatpush.bf16.msra.mxu0 %v318
    %408 = vmatpush.bf16.msra.mxu0 %v317
    %409 = vmatpush.bf16.msra.mxu0 %v316
    %410 = vmatpush.bf16.msra.mxu0 %v315
    %411 = vmatpush.bf16.msra.mxu0 %v314
    %412 = vmatmul.bf16.gmra.mxu0 %v53
    %v413 = vpop.f32.mrf.mxu0
    %v414 = vadd.f32 %v401, %v413
    %v415 = vpop.f32.mrf.mxu0
    %416 = vdwg.mxu0
    %417 = vmatpush.bf16.msra.mxu0 %v329
    %418 = vmatpush.bf16.msra.mxu0 %v328
    %419 = vmatpush.bf16.msra.mxu0 %v327
    %420 = vmatpush.bf16.msra.mxu0 %v326
    %421 = vmatpush.bf16.msra.mxu0 %v325
    %422 = vmatpush.bf16.msra.mxu0 %v324
    %423 = vmatpush.bf16.msra.mxu0 %v323
    %424 = vmatpush.bf16.msra.mxu0 %v322
    %425 = vmatmul.bf16.gmra.mxu0 %v54
    %v426 = vpop.f32.mrf.mxu0
    %v427 = vadd.f32 %v414, %v426
    %v428 = vpop.f32.mrf.mxu0
    %429 = vdwg.mxu0
    %430 = vmatpush.bf16.msra.mxu0 %v337
    %431 = vmatpush.bf16.msra.mxu0 %v336
    %432 = vmatpush.bf16.msra.mxu0 %v335
    %433 = vmatpush.bf16.msra.mxu0 %v334
    %434 = vmatpush.bf16.msra.mxu0 %v333
    %435 = vmatpush.bf16.msra.mxu0 %v332
    %436 = vmatpush.bf16.msra.mxu0 %v331
    %437 = vmatpush.bf16.msra.mxu0 %v330
    %438 = vmatmul.bf16.gmra.mxu0 %v55
    %v439 = vpop.f32.mrf.mxu0
    %v440 = vadd.f32 %v427, %v439
    %v441 = vpop.f32.mrf.mxu0
    %442 = vdwg.mxu0
    %v443 = vxor.u32 %v440, 2147483648
    %v444 = vmul.f32 %v443, 1.442695
    %v445 = vpow.pop %v444
    %v446 = vadd.f32 %v445, 1.0
    %v447 = vrcp.pop %v446
    %v448 = vmul.f32 %v446, %v447
    %v449 = vsub.f32 1.0, %v448
    %v450 = vmul.f32 %v447, %v449
    %v451 = vadd.f32 %v447, %v450
    %vm452 = vweird.f32 %v446
    %vm453 = vweird.f32 %v447
    %vm454 = vmor %vm452, %vm453
    %v455 = vsel %vm454, %v447, %v451
    %v456 = vand.u32 2147483647, %v446
    %vm457 = vcmp.eq.f32.partialorder %v456, 8.507059e+37
    %v458 = vand.u32 %v446, 2147483648
    %v459 = vor.u32 1.1754944e-38, %v458
    %v460 = vsel %vm457, %v459, %v455
    %v461 = vmul.f32 1.0, %v460
    %462 = vst [vmem:[#allocation8] sm:$0xff] %v461
    // Predicated region
    $region22: #{tpu_custom_call.1} parent=1 // pred_check
      _
    $region23: #{tpu_custom_call.1} parent=1 // pred_check_branch
      %464 = sbr.rel (0) target = $region25
    $region24: #{tpu_custom_call.1} parent=1 // pred_region
      %466 = vsyncadd [#allocation5], 0
      %s468 = sshll.u32 [#allocation8], 4
      %s469 = int_to_ptr.vmem [resolvable:$true] %s468
      %s470 = sshll.u32 %s3, 4
      %s471 = int_to_ptr.hbm [resolvable:$true] %s470
      %473 = dma.vmem_to_hbm [thread:$0]  %s469, 128, %s471, [#allocation5]
    $region25: #{tpu_custom_call.1} parent=1 // pred_fallthru
      _
    // Predicated region
    $region26: #{tpu_custom_call.1} parent=1 // pred_check
      _
    $region27: #{tpu_custom_call.1} parent=1 // pred_check_branch
      %475 = sbr.rel (0) target = $region29
    $region28: #{tpu_custom_call.1} parent=1 // pred_region
      %477 = dma.done [#allocation5], 128
    $region29: #{tpu_custom_call.1} parent=1 // pred_fallthru
      _
    %478 = vsyncpa [#allocation4], 1
    %479 = vsyncpa [#allocation7], 1
    %480 = vsyncpa [#allocation5], 1

</llo_original>
